<compile_context>
chip_gen: v5e
topology: v5e:2x2
jax: 0.10.0
libtpu: 0.0.40
codegen_flags: <defaults>
</compile_context>

<pallas_src>
import jax
import jax.numpy as jnp
from jax.experimental import pallas as pl
from jax.experimental.pallas import tpu as pltpu

_LANES = 128            # lane-dense padded class dim
_MAX_TM = 2048          # row-tile cap for the batch grid
_MIN_PALLAS_BATCH = 256  # below this, a plain XLA dot beats a pallas_call launch


def _round_up(v, m):
    return ((v + m - 1) // m) * m


def _row_tile(batch):
    """Row tile for the batch grid.

    B <= 256: single tile (one grid step).  B > 256: guarantee >= 2 grid steps
    so the "parallel" axis shards across v7x's two TensorCores, capped at
    _MAX_TM to amortize the ~0.35 us per-grid-step overhead.
    """
    if batch <= 256:
        return batch
    return min(_MAX_TM, _round_up(pl.cdiv(batch, 2), 8))


def _linear_kernel(x_ref, wt_ref, b_ref, o_ref):
    # x: (TM, depth) f32 or bf16 (astype is a no-op for bf16 inputs),
    # wt: (depth, Np) bf16 (padded, pre-transposed), b: (1, Np) f32.
    # Single MXU matmul with f32 accumulation + VPU bias add, cast on store.
    x_bf = x_ref[...].astype(jnp.bfloat16)
    acc = jnp.dot(x_bf, wt_ref[...], preferred_element_type=jnp.float32)
    o_ref[...] = (acc + b_ref[...]).astype(o_ref.dtype)


def prepare_classifier_params(weight, bias, lanes=_LANES):
    """One-time prep (NOT on the hot path): transpose, pad classes to a
    lane-dense multiple of 128, cast weight to bf16.  Padded weight columns and
    bias lanes are zero, so padded logits never contaminate valid ones."""
    num_classes, depth = weight.shape
    n_pad = pl.cdiv(num_classes, lanes) * lanes
    wt_pad = jnp.zeros((depth, n_pad), jnp.bfloat16)
    wt_pad = wt_pad.at[:, :num_classes].set(weight.T.astype(jnp.bfloat16))
    b_pad = jnp.zeros((1, n_pad), jnp.float32)
    b_pad = b_pad.at[:, :num_classes].set(bias.astype(jnp.float32))
    return wt_pad, b_pad


def classifier_forward_padded(x, wt_pad, b_pad, out_dtype=jnp.float32,
                              use_pallas=None):
    """Returns the PADDED logits (B, n_pad); slice [:, :num_classes] inside the
    consumer's jit so XLA fuses the slice instead of paying an extra HBM pass.

    x: (B, depth) f32 or bf16 (bf16 preferred when the upstream layer can emit
    it -- halves the dominant HBM stream); wt_pad: (depth, n_pad) bf16;
    b_pad: (1, n_pad) f32.
    """
    B, depth = x.shape
    n_pad = wt_pad.shape[1]

    if use_pallas is None:
        use_pallas = B >= _MIN_PALLAS_BATCH
    if not use_pallas:
        # Tiny batch: launch + per-step overhead of a standalone pallas_call
        # dominates; let XLA fuse a plain dot with its neighbours instead.
        acc = jnp.dot(x.astype(jnp.bfloat16), wt_pad,
                      preferred_element_type=jnp.float32)
        return (acc + b_pad).astype(out_dtype)

    tm = _row_tile(B)
    grid = (pl.cdiv(B, tm),)

    out_itemsize = jnp.dtype(out_dtype).itemsize
    cost = pl.CostEstimate(
        flops=2 * B * depth * n_pad,
        transcendentals=0,
        bytes_accessed=(x.size * x.dtype.itemsize
                        + wt_pad.size * wt_pad.dtype.itemsize
                        + b_pad.size * b_pad.dtype.itemsize
                        + B * n_pad * out_itemsize),
    )

    return pl.pallas_call(
        _linear_kernel,
        out_shape=jax.ShapeDtypeStruct((B, n_pad), out_dtype),
        grid=grid,
        in_specs=[
            pl.BlockSpec((tm, depth), lambda i: (i, 0)),
            pl.BlockSpec((depth, n_pad), lambda i: (0, 0)),   # VMEM-resident
            pl.BlockSpec((1, n_pad), lambda i: (0, 0)),       # VMEM-resident
        ],
        out_specs=pl.BlockSpec((tm, n_pad), lambda i: (i, 0)),
        compiler_params=pltpu.CompilerParams(
            dimension_semantics=("parallel",),        # both TCs on v7x
            vmem_limit_bytes=32 * 1024 * 1024,        # needed on v5e for TM>=1024
        ),
        cost_estimate=cost,
    )(x, wt_pad, b_pad)


def classifier_forward(x, wt_pad, b_pad, num_classes, out_dtype=jnp.float32,
                       use_pallas=None):
    """Convenience wrapper returning (B, num_classes).  Prefer calling
    classifier_forward_padded and slicing inside the consumer's jit."""
    out_pad = classifier_forward_padded(x, wt_pad, b_pad, out_dtype=out_dtype,
                                        use_pallas=use_pallas)
    return out_pad[:, :num_classes]


if __name__ == "__main__":
    depth = 512
    num_classes = 2

    key = jax.random.PRNGKey(0)
    kw, kx1, kx2 = jax.random.split(key, 3)

    # Parameter init matching the module's __init__:
    #   fc.weight ~ N(0, 0.01), fc.bias = 0
    weight = 0.01 * jax.random.normal(kw, (num_classes, depth), dtype=jnp.float32)
    bias = jnp.zeros((num_classes,), dtype=jnp.float32)

    # One-time parameter prep (outside the hot path).
    wt_pad, b_pad = prepare_classifier_params(weight, bias)

    # ---- Case 1: module-sized small batch; force the Pallas path so the ----
    # ---- kernel itself is exercised, slice fused inside the same jit.    ----
    batch = 8
    x = jax.random.normal(kx1, (batch, depth), dtype=jnp.float32)

    @jax.jit
    def head_small(x):
        pad = classifier_forward_padded(x, wt_pad, b_pad,
                                        out_dtype=jnp.float32, use_pallas=True)
        return pad[:, :num_classes]   # fused with the consumer, not a standalone pass

    out = jax.block_until_ready(head_small(x))
    assert out.shape == (batch, num_classes)

    # Precision-matched reference (bf16 operands, f32 accumulation).
    ref_bf16 = (jnp.dot(x.astype(jnp.bfloat16), weight.T.astype(jnp.bfloat16),
                        preferred_element_type=jnp.float32) + bias)
    assert jnp.allclose(out, ref_bf16, atol=1e-4, rtol=1e-4)

    # Full-precision reference (loose tolerance accounts for bf16 operands).
    ref_f32 = x @ weight.T + bias
    assert jnp.allclose(out, ref_f32, atol=1e-2, rtol=1e-2)

    # ---- Case 2: larger batch -> >= 2 grid steps (v7x two-TC split), a ----
    # ---- partial last row tile, bf16 activations and bf16 logits.      ----
    batch2 = 600
    x2 = jax.random.normal(kx2, (batch2, depth),
                           dtype=jnp.float32).astype(jnp.bfloat16)

    @jax.jit
    def head_large(x):
        pad = classifier_forward_padded(x, wt_pad, b_pad, out_dtype=jnp.bfloat16)
        return pad[:, :num_classes]

    out2 = jax.block_until_ready(head_large(x2))
    assert out2.shape == (batch2, num_classes)

    ref2 = (jnp.dot(x2, weight.T.astype(jnp.bfloat16),
                    preferred_element_type=jnp.float32) + bias)
    assert jnp.allclose(out2.astype(jnp.float32), ref2, atol=1e-2, rtol=1e-2)

    print("KERNEL_OK")
</pallas_src>

<mosaic_0001>
module attributes {stable_mosaic.version = 11 : i64} {
  func.func @_linear_kernel(%arg0: i32, %arg1: memref<8x512xf32, #tpu.memory_space<vmem>>, %arg2: memref<512x128xbf16, #tpu.memory_space<vmem>>, %arg3: memref<1x128xf32, #tpu.memory_space<vmem>>, %arg4: memref<8x128xf32, #tpu.memory_space<vmem>>) attributes {dimension_semantics = [#tpu.dimension_semantics<parallel>], iteration_bounds = array<i64: 1>, scalar_prefetch = 0 : i64, scratch_operands = 0 : i64, tpu.core_type = #tpu.core_type<tc>, window_params = [{transform_indices = @transform_0, window_bounds = array<i64: 8, 512>}, {pipeline_mode = #tpu.pipeline_mode<synchronous>, transform_indices = @transform_1, window_bounds = array<i64: 512, 128>}, {pipeline_mode = #tpu.pipeline_mode<synchronous>, transform_indices = @transform_2, window_bounds = array<i64: 1, 128>}, {transform_indices = @transform_3, window_bounds = array<i64: 8, 128>}]} {
    %c0 = arith.constant 0 : index
    %c0_0 = arith.constant 0 : index
    %0 = vector.load %arg1[%c0, %c0_0] : memref<8x512xf32, #tpu.memory_space<vmem>>, vector<8x512xf32>
    %1 = arith.truncf %0 : vector<8x512xf32> to vector<8x512xbf16>
    %c0_1 = arith.constant 0 : index
    %c0_2 = arith.constant 0 : index
    %2 = vector.load %arg2[%c0_1, %c0_2] : memref<512x128xbf16, #tpu.memory_space<vmem>>, vector<512x128xbf16>
    %cst = arith.constant dense<0.000000e+00> : vector<8x128xf32>
    %3 = tpu.matmul %1, %2, %cst {dimension_numbers = #tpu.dot_dimension_numbers<[1], [0], [0], [1], [0, 0, 1, 1], [], []>} : vector<8x512xbf16>, vector<512x128xbf16>, vector<8x128xf32> -> vector<8x128xf32>
    %c0_3 = arith.constant 0 : index
    %c0_4 = arith.constant 0 : index
    %4 = vector.load %arg3[%c0_3, %c0_4] : memref<1x128xf32, #tpu.memory_space<vmem>>, vector<1x128xf32>
    %5 = vector.broadcast %4 : vector<1x128xf32> to vector<8x128xf32>
    %6 = arith.addf %3, %5 : vector<8x128xf32>
    %c0_5 = arith.constant 0 : index
    %c0_6 = arith.constant 0 : index
    %7 = vector.load %arg4[%c0_5, %c0_6] : memref<8x128xf32, #tpu.memory_space<vmem>>, vector<8x128xf32>
    tpu.vector_store %arg4[%c0_5, %c0_6], %6 {strides = array<i32>} : memref<8x128xf32, #tpu.memory_space<vmem>>, vector<8x128xf32>,
    return
  }
  func.func @transform_0(%arg0: i32) -> (i32, i32) {
    %c0_i32 = arith.constant 0 : i32
    %c0_i32_0 = arith.constant 0 : i32
    return %arg0, %c0_i32 : i32, i32
  }
  func.func @transform_1(%arg0: i32) -> (i32, i32) {
    %c0_i32 = arith.constant 0 : i32
    %c0_i32_0 = arith.constant 0 : i32
    %c0_i32_1 = arith.constant 0 : i32
    return %c0_i32, %c0_i32_0 : i32, i32
  }
  func.func @transform_2(%arg0: i32) -> (i32, i32) {
    %c0_i32 = arith.constant 0 : i32
    %c0_i32_0 = arith.constant 0 : i32
    %c0_i32_1 = arith.constant 0 : i32
    return %c0_i32, %c0_i32_0 : i32, i32
  }
  func.func @transform_3(%arg0: i32) -> (i32, i32) {
    %c0_i32 = arith.constant 0 : i32
    %c0_i32_0 = arith.constant 0 : i32
    return %arg0, %c0_i32 : i32, i32
  }
}

</mosaic_0001>

<llo_original>
// kernel: head_small.1
$region0: #{head_small.1}
  #allocation0 [shape = 'u32[]', space=smem, size = 0x4, offset = 0x4, fixed_abs, tag = 'smem constant byte address 0x4 - core index']
  #allocation1 [shape = 'u32[72,128]{1,0:T(1,128)}', space=vmem, size = 0x9000, scoped, tag = 'internal scratch']
  %s0 = inlined_call_operand.hbm [shape: f32[8,512], index: 0, kind: input, shape index: {}]
  %s1 = inlined_call_operand.hbm [shape: bf16[512,128], index: 1, kind: input, shape index: {}]
  %s2 = inlined_call_operand.vmem [shape: f32[1,128], index: 2, kind: input, shape index: {}]
  %s3 = inlined_call_operand.vmem [shape: f32[8,128], index: 3, kind: output, shape index: {}]
  %s4 = sld [smem:[#allocation0]]
  $region30: #{head_small.1} parent=0
    _
  %s6 = ssub.s32 1, %s4
  %s7 = scalar_select 0, %s6, %s4
  $region1: #{head_small.1} parent=0
    #allocation2 [shape = 'u8[16384]{0}', space=vmem, size = 0x4000, scoped, tag = 'input window, operand 0, single buffered']
    #allocation3 [shape = 's32[1]{0}', space=sflag, size = 0x4, scoped, tag = 'scoped memory for head_small.1']
    #allocation4 [shape = 'u8[131072]{0}', space=vmem, size = 0x20000, scoped, tag = 'input window, operand 1, single buffered']
    #allocation5 [shape = 's32[1]{0}', space=sflag, size = 0x4, scoped, tag = 'scoped memory for head_small.1']
    %8 = vsyncpa [#allocation3], 0
    %9 = vsyncpa [#allocation5], 0
    // Predicated region
    $region2: #{head_small.1} parent=1 // pred_check
      _
    $region3: #{head_small.1} parent=1 // pred_check_branch
      %11 = sbr.rel (0) target = $region5
    $region4: #{head_small.1} parent=1 // pred_region
      %13 = vsyncadd [#allocation3], 0
      %s15 = sshll.u32 %s0, 4
      %s16 = int_to_ptr.hbm [resolvable:$true] %s15
      %s17 = sshll.u32 [#allocation2], 4
      %s18 = int_to_ptr.vmem [resolvable:$true] %s17
      %20 = dma.hbm_to_vmem [thread:$0]  %s16, 512, %s18, [#allocation3]
    $region5: #{head_small.1} parent=1 // pred_fallthru
      _
    // Predicated region
    $region6: #{head_small.1} parent=1 // pred_check
      _
    $region7: #{head_small.1} parent=1 // pred_check_branch
      %22 = sbr.rel (0) target = $region9
    $region8: #{head_small.1} parent=1 // pred_region
      %24 = vsyncadd [#allocation5], 0
      %s25 = sshll.u32 %s1, 4
      %s26 = int_to_ptr.hbm [resolvable:$true] %s25
      %s27 = sshll.u32 [#allocation4], 4
      %s28 = int_to_ptr.vmem [resolvable:$true] %s27
      %33 = dma.hbm_to_vmem [thread:$0]  %s26, 4096, %s28, [#allocation5], 64, 64, 4
    $region9: #{head_small.1} parent=1 // pred_fallthru
      _
    // Predicated region
    $region10: #{head_small.1} parent=1 // pred_check
      _
    $region11: #{head_small.1} parent=1 // pred_check_branch
      %35 = sbr.rel (0) target = $region13
    $region12: #{head_small.1} parent=1 // pred_region
      _
    $region13: #{head_small.1} parent=1 // pred_fallthru
      _
    // Predicated region
    $region14: #{head_small.1} parent=1 // pred_check
      _
    $region15: #{head_small.1} parent=1 // pred_check_branch
      %37 = sbr.rel (0) target = $region17
    $region16: #{head_small.1} parent=1 // pred_region
      %39 = dma.done [#allocation3], 512
    $region17: #{head_small.1} parent=1 // pred_fallthru
      _
    // Predicated region
    $region18: #{head_small.1} parent=1 // pred_check
      _
    $region19: #{head_small.1} parent=1 // pred_check_branch
      %41 = sbr.rel (0) target = $region21
    $region20: #{head_small.1} parent=1 // pred_region
      %43 = dma.done [#allocation5], 4096
    $region21: #{head_small.1} parent=1 // pred_fallthru
      _
    %v44 = vld [vmem:[#allocation2] sm:$0xff]
    %v45 = vld [vmem:[#allocation2 + $0x8] sm:$0xff]
    %v46 = vld [vmem:[#allocation2 + $0x10] sm:$0xff]
    %v47 = vld [vmem:[#allocation2 + $0x18] sm:$0xff]
    %v48 = vpack.c.bf16 %v44, %v44
    %v49 = vpack.c.bf16 %v45, %v45
    %v50 = vpack.c.bf16 %v46, %v46
    %v51 = vpack.c.bf16 %v47, %v47
    %v52 = vld [vmem:[#allocation4] sm:$0xf]
    %v53 = vld [vmem:[#allocation4 + $0x4] sm:$0xf]
    %v54 = vld [vmem:[#allocation4 + $0x8] sm:$0xf]
    %v55 = vld [vmem:[#allocation4 + $0xc] sm:$0xf]
    %v56 = vld [vmem:[#allocation4 + $0x10] sm:$0xf]
    %v57 = vld [vmem:[#allocation4 + $0x14] sm:$0xf]
    %v58 = vld [vmem:[#allocation4 + $0x18] sm:$0xf]
    %v59 = vld [vmem:[#allocation4 + $0x1c] sm:$0xf]
    %v60 = vld [vmem:[#allocation4 + $0x20] sm:$0xf]
    %v61 = vld [vmem:[#allocation4 + $0x24] sm:$0xf]
    %v62 = vld [vmem:[#allocation4 + $0x28] sm:$0xf]
    %v63 = vld [vmem:[#allocation4 + $0x2c] sm:$0xf]
    %v64 = vld [vmem:[#allocation4 + $0x30] sm:$0xf]
    %v65 = vld [vmem:[#allocation4 + $0x34] sm:$0xf]
    %v66 = vld [vmem:[#allocation4 + $0x38] sm:$0xf]
    %v67 = vld [vmem:[#allocation4 + $0x3c] sm:$0xf]
    %v68 = vld [vmem:[#allocation4 + $0x40] sm:$0xf]
    %v69 = vld [vmem:[#allocation4 + $0x44] sm:$0xf]
    %v70 = vld [vmem:[#allocation4 + $0x48] sm:$0xf]
    %v71 = vld [vmem:[#allocation4 + $0x4c] sm:$0xf]
    %v72 = vld [vmem:[#allocation4 + $0x50] sm:$0xf]
    %v73 = vld [vmem:[#allocation4 + $0x54] sm:$0xf]
    %v74 = vld [vmem:[#allocation4 + $0x58] sm:$0xf]
    %v75 = vld [vmem:[#allocation4 + $0x5c] sm:$0xf]
    %v76 = vld [vmem:[#allocation4 + $0x60] sm:$0xf]
    %v77 = vld [vmem:[#allocation4 + $0x64] sm:$0xf]
    %v78 = vld [vmem:[#allocation4 + $0x68] sm:$0xf]
    %v79 = vld [vmem:[#allocation4 + $0x6c] sm:$0xf]
    %v80 = vld [vmem:[#allocation4 + $0x70] sm:$0xf]
    %v81 = vld [vmem:[#allocation4 + $0x74] sm:$0xf]
    %v82 = vld [vmem:[#allocation4 + $0x78] sm:$0xf]
    %v83 = vld [vmem:[#allocation4 + $0x7c] sm:$0xf]
    %v84 = vld [vmem:[#allocation4 + $0x80] sm:$0xf]
    %v85 = vld [vmem:[#allocation4 + $0x84] sm:$0xf]
    %v86 = vld [vmem:[#allocation4 + $0x88] sm:$0xf]
    %v87 = vld [vmem:[#allocation4 + $0x8c] sm:$0xf]
    %v88 = vld [vmem:[#allocation4 + $0x90] sm:$0xf]
    %v89 = vld [vmem:[#allocation4 + $0x94] sm:$0xf]
    %v90 = vld [vmem:[#allocation4 + $0x98] sm:$0xf]
    %v91 = vld [vmem:[#allocation4 + $0x9c] sm:$0xf]
    %v92 = vld [vmem:[#allocation4 + $0xa0] sm:$0xf]
    %v93 = vld [vmem:[#allocation4 + $0xa4] sm:$0xf]
    %v94 = vld [vmem:[#allocation4 + $0xa8] sm:$0xf]
    %v95 = vld [vmem:[#allocation4 + $0xac] sm:$0xf]
    %v96 = vld [vmem:[#allocation4 + $0xb0] sm:$0xf]
    %v97 = vld [vmem:[#allocation4 + $0xb4] sm:$0xf]
    %v98 = vld [vmem:[#allocation4 + $0xb8] sm:$0xf]
    %v99 = vld [vmem:[#allocation4 + $0xbc] sm:$0xf]
    %v100 = vld [vmem:[#allocation4 + $0xc0] sm:$0xf]
    %v101 = vld [vmem:[#allocation4 + $0xc4] sm:$0xf]
    %v102 = vld [vmem:[#allocation4 + $0xc8] sm:$0xf]
    %v103 = vld [vmem:[#allocation4 + $0xcc] sm:$0xf]
    %v104 = vld [vmem:[#allocation4 + $0xd0] sm:$0xf]
    %v105 = vld [vmem:[#allocation4 + $0xd4] sm:$0xf]
    %v106 = vld [vmem:[#allocation4 + $0xd8] sm:$0xf]
    %v107 = vld [vmem:[#allocation4 + $0xdc] sm:$0xf]
    %v108 = vld [vmem:[#allocation4 + $0xe0] sm:$0xf]
    %v109 = vld [vmem:[#allocation4 + $0xe4] sm:$0xf]
    %v110 = vld [vmem:[#allocation4 + $0xe8] sm:$0xf]
    %v111 = vld [vmem:[#allocation4 + $0xec] sm:$0xf]
    %v112 = vld [vmem:[#allocation4 + $0xf0] sm:$0xf]
    %v113 = vld [vmem:[#allocation4 + $0xf4] sm:$0xf]
    %v114 = vld [vmem:[#allocation4 + $0xf8] sm:$0xf]
    %v115 = vld [vmem:[#allocation4 + $0xfc] sm:$0xf]
    %v116 = vld [vmem:[%s2] sm:$0x1]
    %v118 = vperm.slane %v116, 0
    %v184 = vunpack.c.l.b16 %v52
    %v185 = vunpack.c.l.b16 %v53
    %v186 = vunpack.c.l.b16 %v54
    %v187 = vunpack.c.l.b16 %v55
    %v188 = vunpack.c.l.b16 %v56
    %v189 = vunpack.c.l.b16 %v57
    %v190 = vunpack.c.l.b16 %v58
    %v191 = vunpack.c.l.b16 %v59
    %v192 = vunpack.c.l.b16 %v60
    %v193 = vunpack.c.l.b16 %v61
    %v194 = vunpack.c.l.b16 %v62
    %v195 = vunpack.c.l.b16 %v63
    %v196 = vunpack.c.l.b16 %v64
    %v197 = vunpack.c.l.b16 %v65
    %v198 = vunpack.c.l.b16 %v66
    %v199 = vunpack.c.l.b16 %v67
    %v200 = vunpack.c.l.b16 %v68
    %v201 = vunpack.c.l.b16 %v69
    %v202 = vunpack.c.l.b16 %v70
    %v203 = vunpack.c.l.b16 %v71
    %v204 = vunpack.c.l.b16 %v72
    %v205 = vunpack.c.l.b16 %v73
    %v206 = vunpack.c.l.b16 %v74
    %v207 = vunpack.c.l.b16 %v75
    %v208 = vunpack.c.l.b16 %v76
    %v209 = vunpack.c.l.b16 %v77
    %v210 = vunpack.c.l.b16 %v78
    %v211 = vunpack.c.l.b16 %v79
    %v212 = vunpack.c.l.b16 %v80
    %v213 = vunpack.c.l.b16 %v81
    %v214 = vunpack.c.l.b16 %v82
    %v215 = vunpack.c.l.b16 %v83
    %v216 = vunpack.c.l.b16 %v84
    %v217 = vunpack.c.l.b16 %v85
    %v218 = vunpack.c.l.b16 %v86
    %v219 = vunpack.c.l.b16 %v87
    %v220 = vunpack.c.l.b16 %v88
    %v221 = vunpack.c.l.b16 %v89
    %v222 = vunpack.c.l.b16 %v90
    %v223 = vunpack.c.l.b16 %v91
    %v224 = vunpack.c.l.b16 %v92
    %v225 = vunpack.c.l.b16 %v93
    %v226 = vunpack.c.l.b16 %v94
    %v227 = vunpack.c.l.b16 %v95
    %v228 = vunpack.c.l.b16 %v96
    %v229 = vunpack.c.l.b16 %v97
    %v230 = vunpack.c.l.b16 %v98
    %v231 = vunpack.c.l.b16 %v99
    %v232 = vunpack.c.l.b16 %v100
    %v233 = vunpack.c.l.b16 %v101
    %v234 = vunpack.c.l.b16 %v102
    %v235 = vunpack.c.l.b16 %v103
    %v236 = vunpack.c.l.b16 %v104
    %v237 = vunpack.c.l.b16 %v105
    %v238 = vunpack.c.l.b16 %v106
    %v239 = vunpack.c.l.b16 %v107
    %v240 = vunpack.c.l.b16 %v108
    %v241 = vunpack.c.l.b16 %v109
    %v242 = vunpack.c.l.b16 %v110
    %v243 = vunpack.c.l.b16 %v111
    %v244 = vunpack.c.l.b16 %v112
    %v245 = vunpack.c.l.b16 %v113
    %v246 = vunpack.c.l.b16 %v114
    %v247 = vunpack.c.l.b16 %v115
    %v248 = vpack.c.b16 %v185, %v184
    %v249 = vpack.c.b16 %v187, %v186
    %v250 = vpack.c.b16 %v189, %v188
    %v251 = vpack.c.b16 %v191, %v190
    %v252 = vpack.c.b16 %v193, %v192
    %v253 = vpack.c.b16 %v195, %v194
    %v254 = vpack.c.b16 %v197, %v196
    %v255 = vpack.c.b16 %v199, %v198
    %v256 = vpack.c.b16 %v201, %v200
    %v257 = vpack.c.b16 %v203, %v202
    %v258 = vpack.c.b16 %v205, %v204
    %v259 = vpack.c.b16 %v207, %v206
    %v260 = vpack.c.b16 %v209, %v208
    %v261 = vpack.c.b16 %v211, %v210
    %v262 = vpack.c.b16 %v213, %v212
    %v263 = vpack.c.b16 %v215, %v214
    %v264 = vpack.c.b16 %v217, %v216
    %v265 = vpack.c.b16 %v219, %v218
    %v266 = vpack.c.b16 %v221, %v220
    %v267 = vpack.c.b16 %v223, %v222
    %v268 = vpack.c.b16 %v225, %v224
    %v269 = vpack.c.b16 %v227, %v226
    %v270 = vpack.c.b16 %v229, %v228
    %v271 = vpack.c.b16 %v231, %v230
    %v272 = vpack.c.b16 %v233, %v232
    %v273 = vpack.c.b16 %v235, %v234
    %v274 = vpack.c.b16 %v237, %v236
    %v275 = vpack.c.b16 %v239, %v238
    %v276 = vpack.c.b16 %v241, %v240
    %v277 = vpack.c.b16 %v243, %v242
    %v278 = vpack.c.b16 %v245, %v244
    %v279 = vpack.c.b16 %v247, %v246
    %312 = vmatpush.bf16.msra.mxu0 %v255
    %313 = vmatpush.bf16.msra.mxu0 %v254
    %314 = vmatpush.bf16.msra.mxu0 %v253
    %315 = vmatpush.bf16.msra.mxu0 %v252
    %316 = vmatpush.bf16.msra.mxu0 %v251
    %317 = vmatpush.bf16.msra.mxu0 %v250
    %318 = vmatpush.bf16.msra.mxu0 %v249
    %319 = vmatpush.bf16.msra.mxu0 %v248
    %320 = vmatmul.bf16.gmra.mxu0 %v48
    %v321 = vpop.f32.mrf.mxu0
    %v322 = vadd.f32 %v118, %v321
    %v323 = vpop.f32.mrf.mxu0
    %324 = vdwg.mxu0
    %325 = vmatpush.bf16.msra.mxu0 %v263
    %326 = vmatpush.bf16.msra.mxu0 %v262
    %327 = vmatpush.bf16.msra.mxu0 %v261
    %328 = vmatpush.bf16.msra.mxu0 %v260
    %329 = vmatpush.bf16.msra.mxu0 %v259
    %330 = vmatpush.bf16.msra.mxu0 %v258
    %331 = vmatpush.bf16.msra.mxu0 %v257
    %332 = vmatpush.bf16.msra.mxu0 %v256
    %333 = vmatmul.bf16.gmra.mxu0 %v49
    %v334 = vpop.f32.mrf.mxu0
    %v335 = vadd.f32 %v322, %v334
    %v336 = vpop.f32.mrf.mxu0
    %337 = vdwg.mxu0
    %338 = vmatpush.bf16.msra.mxu0 %v271
    %339 = vmatpush.bf16.msra.mxu0 %v270
    %340 = vmatpush.bf16.msra.mxu0 %v269
    %341 = vmatpush.bf16.msra.mxu0 %v268
    %342 = vmatpush.bf16.msra.mxu0 %v267
    %343 = vmatpush.bf16.msra.mxu0 %v266
    %344 = vmatpush.bf16.msra.mxu0 %v265
    %345 = vmatpush.bf16.msra.mxu0 %v264
    %346 = vmatmul.bf16.gmra.mxu0 %v50
    %v347 = vpop.f32.mrf.mxu0
    %v348 = vadd.f32 %v335, %v347
    %v349 = vpop.f32.mrf.mxu0
    %350 = vdwg.mxu0
    %351 = vmatpush.bf16.msra.mxu0 %v279
    %352 = vmatpush.bf16.msra.mxu0 %v278
    %353 = vmatpush.bf16.msra.mxu0 %v277
    %354 = vmatpush.bf16.msra.mxu0 %v276
    %355 = vmatpush.bf16.msra.mxu0 %v275
    %356 = vmatpush.bf16.msra.mxu0 %v274
    %357 = vmatpush.bf16.msra.mxu0 %v273
    %358 = vmatpush.bf16.msra.mxu0 %v272
    %359 = vmatmul.bf16.gmra.mxu0 %v51
    %v360 = vpop.f32.mrf.mxu0
    %v361 = vadd.f32 %v348, %v360
    %v362 = vpop.f32.mrf.mxu0
    %363 = vdwg.mxu0
    %364 = vst [vmem:[%s3] sm:$0xff] %v361
    // Predicated region
    $region22: #{head_small.1} parent=1 // pred_check
      _
    $region23: #{head_small.1} parent=1 // pred_check_branch
      %366 = sbr.rel (0) target = $region25
    $region24: #{head_small.1} parent=1 // pred_region
      _
    $region25: #{head_small.1} parent=1 // pred_fallthru
      _
    // Predicated region
    $region26: #{head_small.1} parent=1 // pred_check
      _
    $region27: #{head_small.1} parent=1 // pred_check_branch
      %368 = sbr.rel (0) target = $region29
    $region28: #{head_small.1} parent=1 // pred_region
      _
    $region29: #{head_small.1} parent=1 // pred_fallthru
      _
    %369 = vsyncpa [#allocation3], 1
    %370 = vsyncpa [#allocation5], 1

</llo_original>
